<compile_context>
chip_gen: v7x
topology: tpu7x:2x2x1
jax: 0.10.0
libtpu: 0.0.40
codegen_flags: <defaults>
</compile_context>

<pallas_src>
import functools
import math

import jax
import jax.numpy as jnp
from jax import lax
from jax.experimental import pallas as pl
from jax.experimental.pallas import tpu as pltpu


_NEG = -1e30  # finite "minus infinity": the hinge clamp folds it to exactly 0


def _round_up(x, m):
    return ((x + m - 1) // m) * m


def _next_pow2(x):
    x = int(x)
    return 1 if x <= 1 else 1 << (x - 1).bit_length()


def _scores_tile(img_ref, txt_ref):
    # MXU: img_i @ txt_j.T, contracting D; bf16 operands stay bf16, f32 accum.
    return lax.dot_general(
        img_ref[...], txt_ref[...],
        dimension_numbers=(((1,), (1,)), ((), ())),
        preferred_element_type=jnp.float32)


def _masked_costs(scores, pos_r, pos_c, i, j, tile_i, tile_j, n_valid, n_pad,
                  margin):
    """Hinge costs for one (tile_i, tile_j) scores tile, diag/pad masked."""
    # Small (tile_i,1)/(1,tile_j) iotas + broadcast compares instead of two
    # full (T,T) int32 tensors (vreg pressure once tiles grow).
    row_ids = i * tile_i + lax.broadcasted_iota(jnp.int32, (tile_i, 1), 0)
    col_ids = j * tile_j + lax.broadcasted_iota(jnp.int32, (1, tile_j), 1)
    masked = row_ids == col_ids                            # diagonal
    if n_valid < n_pad:                                    # padded rows / cols
        masked = masked | (row_ids >= n_valid) | (col_ids >= n_valid)
    scores = jnp.where(masked, _NEG, scores)
    cost_s = jnp.maximum(scores + (margin - pos_r), 0.0)   # caption retrieval
    cost_im = jnp.maximum(scores + (margin - pos_c), 0.0)  # image retrieval
    return cost_s, cost_im


def _maxviol_kernel(img_ref, txt_ref, pos_r_ref, pos_c_ref,
                    row_out_ref, col_out_ref, row_max_ref,
                    *, tile_i, tile_j, n_valid, n_pad, margin):
    i = pl.program_id(0)
    j = pl.program_id(1)
    nj = pl.num_programs(1)

    scores = _scores_tile(img_ref, txt_ref)
    cost_s, cost_im = _masked_costs(scores, pos_r_ref[...], pos_c_ref[...],
                                    i, j, tile_i, tile_j, n_valid, n_pad,
                                    margin)

    # Per-(i,j) column-max partial written straight to its own output block
    # (no cross-i carry -> row axis can be "parallel"/megacore-sharded).
    col_out_ref[0] = jnp.max(cost_im, axis=0, keepdims=True)       # (1,tile_j)

    # Running row max over the j sweep; flushed to the output at the last j.
    tile_row_max = jnp.max(cost_s, axis=1, keepdims=True)          # (tile_i,1)

    @pl.when(j == 0)
    def _():
        row_max_ref[...] = tile_row_max

    @pl.when(j > 0)
    def _():
        row_max_ref[...] = jnp.maximum(row_max_ref[...], tile_row_max)

    @pl.when(j == nj - 1)
    def _():
        row_out_ref[...] = row_max_ref[...]


def _sum_kernel(img_ref, txt_ref, pos_r_ref, pos_c_ref,
                sum_out_ref, acc_ref,
                *, tile_i, tile_j, n_valid, n_pad, margin):
    i = pl.program_id(0)
    j = pl.program_id(1)
    nj = pl.num_programs(1)

    scores = _scores_tile(img_ref, txt_ref)
    cost_s, cost_im = _masked_costs(scores, pos_r_ref[...], pos_c_ref[...],
                                    i, j, tile_i, tile_j, n_valid, n_pad,
                                    margin)

    # Vector-shaped partial sums in VMEM; the expensive full reduce to the
    # per-row-tile SMEM scalar happens once, at the last j.
    tile_total = cost_s + cost_im

    @pl.when(j == 0)
    def _():
        acc_ref[...] = tile_total

    @pl.when(j > 0)
    def _():
        acc_ref[...] = acc_ref[...] + tile_total

    @pl.when(j == nj - 1)
    def _():
        sum_out_ref[0, 0] = jnp.sum(acc_ref[...])


def contrastive_loss(image, text, *, margin=0.3, max_violation=True,
                     tile_i=256, tile_j=256, cast_to_bf16=False):
    """image, text: (N, D) arrays (f32 or bf16). Returns the scalar f32 loss."""
    assert image.shape == text.shape and image.ndim == 2
    n, d = image.shape

    # Positive (diagonal) scores, computed once in f32 (tiny XLA op).
    pos = jnp.sum(image.astype(jnp.float32) * text.astype(jnp.float32),
                  axis=-1, keepdims=True)                           # (n, 1)

    if cast_to_bf16 and image.dtype == jnp.float32:
        # Native-bf16 MXU path: half the DMA bytes, 2-3x matmul throughput.
        # Numeric tradeoff acceptable for a hinge loss (pos stays f32).
        image = image.astype(jnp.bfloat16)
        text = text.astype(jnp.bfloat16)

    itemsize = jnp.dtype(image.dtype).itemsize
    sub_min = max(8, 32 // itemsize)          # 8 f32 / 16 bf16 / 32 int8|fp8

    # Power-of-two tiles keep n_pad = round_up(n, max(tile)) tight.  tile_j is
    # a multiple of 128 (lane/MXU width).  Raise tile_i to 512 on v6e if VMEM
    # allows; keep 256 on v5e/v7x.
    tile_i = max(sub_min, min(_next_pow2(tile_i), _next_pow2(n)))
    tile_j = max(128, min(_next_pow2(tile_j), _next_pow2(n)))

    n_pad = _round_up(n, max(tile_i, tile_j))
    d_pad = _round_up(d, 128)
    # TODO(synk): for very large D (>= 8K) add a third grid axis over D with a
    # (tile_i, tile_j) f32 accumulator to stay inside v7x's 64 MiB VMEM.

    if (n_pad, d_pad) != (n, d):
        image = jnp.pad(image, ((0, n_pad - n), (0, d_pad - d)))
        text = jnp.pad(text, ((0, n_pad - n), (0, d_pad - d)))
    if n_pad != n:
        pos = jnp.pad(pos, ((0, n_pad - n), (0, 0)))
    pos_t = pos.reshape(1, n_pad)             # column view of the diagonal

    ni, nj = n_pad // tile_i, n_pad // tile_j
    grid = (ni, nj)

    img_spec = pl.BlockSpec((tile_i, d_pad), lambda i, j: (i, 0))  # resident
    txt_kwargs = {}
    if d_pad <= 512 and nj >= 4:
        # Small D => short per-step MXU time vs. the (tile_j, D) DMA; deepen
        # buffering on the streamed text operand (mainly helps v6e).
        txt_kwargs["pipeline_mode"] = pl.Buffered(3)
    txt_spec = pl.BlockSpec((tile_j, d_pad), lambda i, j: (j, 0), **txt_kwargs)
    pos_r_spec = pl.BlockSpec((tile_i, 1), lambda i, j: (i, 0))
    pos_c_spec = pl.BlockSpec((1, tile_j), lambda i, j: (0, j))

    compiler_params = pltpu.CompilerParams(
        # No cross-i carry -> row axis "parallel" (v7x second TensorCore).
        dimension_semantics=("parallel", "arbitrary"),
        vmem_limit_bytes=48 * 1024 * 1024)

    common = dict(tile_i=tile_i, tile_j=tile_j, n_valid=n, n_pad=n_pad,
                  margin=float(margin))

    if max_violation:
        kernel = functools.partial(_maxviol_kernel, **common)
        row_max, col_part = pl.pallas_call(
            kernel,
            out_shape=(jax.ShapeDtypeStruct((n_pad, 1), jnp.float32),
                       jax.ShapeDtypeStruct((ni, 1, n_pad), jnp.float32)),
            grid_spec=pltpu.PrefetchScalarGridSpec(
                num_scalar_prefetch=0,
                grid=grid,
                in_specs=[img_spec, txt_spec, pos_r_spec, pos_c_spec],
                out_specs=[
                    pl.BlockSpec((tile_i, 1), lambda i, j: (i, 0)),
                    pl.BlockSpec((1, 1, tile_j), lambda i, j: (i, 0, j)),
                ],
                scratch_shapes=[pltpu.VMEM((tile_i, 1), jnp.float32)]),
            compiler_params=compiler_params,
        )(image, text, pos, pos_t)
        # Tiny trailing reductions over the per-row-tile partials (KBs).
        col_max = jnp.max(col_part[:, 0, :], axis=0)                # (n_pad,)
        return (jnp.sum(row_max) + jnp.sum(col_max)) / float(n)
    else:
        kernel = functools.partial(_sum_kernel, **common)
        part = pl.pallas_call(
            kernel,
            out_shape=jax.ShapeDtypeStruct((ni, 1), jnp.float32),
            grid_spec=pltpu.PrefetchScalarGridSpec(
                num_scalar_prefetch=0,
                grid=grid,
                in_specs=[img_spec, txt_spec, pos_r_spec, pos_c_spec],
                out_specs=pl.BlockSpec((1, 1), lambda i, j: (i, 0),
                                       memory_space=pltpu.SMEM),
                scratch_shapes=[pltpu.VMEM((tile_i, tile_j), jnp.float32)]),
            compiler_params=compiler_params,
        )(image, text, pos, pos_t)
        return jnp.sum(part) / float(n * n)


def _reference(image, text, margin=0.3, max_violation=True):
    image = image.astype(jnp.float32)
    text = text.astype(jnp.float32)
    scores = jnp.dot(image, text.T, precision=lax.Precision.HIGHEST)
    pos = jnp.diag(scores)[:, None]
    cost_s = jnp.maximum(margin + scores - pos, 0.0)
    cost_im = jnp.maximum(margin + scores - pos.T, 0.0)
    eye = jnp.eye(scores.shape[0], dtype=bool)
    cost_s = jnp.where(eye, 0.0, cost_s)
    cost_im = jnp.where(eye, 0.0, cost_im)
    if max_violation:
        cost_s = cost_s.max(axis=1)
        cost_im = cost_im.max(axis=0)
    return cost_s.mean() + cost_im.mean()


if __name__ == "__main__":
    key = jax.random.PRNGKey(0)
    k1, k2, k3, k4 = jax.random.split(key, 4)

    # Test 1: ragged N/D, 3x3 grid of 128x128 tiles, max-violation path
    # (exercises padding + fused mask + per-(i,j) col-max partials).
    n1, d1 = 300, 48
    image1 = jax.random.normal(k1, (n1, d1), dtype=jnp.float32)
    text1 = jax.random.normal(k2, (n1, d1), dtype=jnp.float32)
    loss1 = jax.block_until_ready(
        contrastive_loss(image1, text1, tile_i=128, tile_j=128))
    ref1 = _reference(image1, text1)
    assert jnp.allclose(loss1, ref1, rtol=2e-4, atol=2e-4), (loss1, ref1)

    # Test 2: unequal row/col tiles (tile_i < tile_j), 6x3 grid, maxviol.
    loss2 = jax.block_until_ready(
        contrastive_loss(image1, text1, tile_i=64, tile_j=128))
    assert jnp.allclose(loss2, ref1, rtol=2e-4, atol=2e-4), (loss2, ref1)

    # Test 3: default 256x256 tiles (2x2 grid after padding 300 -> 512).
    loss3 = jax.block_until_ready(contrastive_loss(image1, text1))
    assert jnp.allclose(loss3, ref1, rtol=2e-4, atol=2e-4), (loss3, ref1)

    # Test 4: sum-reduction branch (max_violation=False), VMEM partial sums.
    loss4 = jax.block_until_ready(
        contrastive_loss(image1, text1, max_violation=False,
                         tile_i=64, tile_j=128))
    ref4 = _reference(image1, text1, max_violation=False)
    assert jnp.allclose(loss4, ref4, rtol=2e-4, atol=2e-4), (loss4, ref4)

    # Test 5: bf16 operands stay bf16 on the MXU (f32 accumulation,
    # dtype-aware 16-row minimum sublane tile).
    n5, d5 = 128, 64
    image5 = jax.random.normal(k3, (n5, d5), dtype=jnp.float32)
    text5 = jax.random.normal(k4, (n5, d5), dtype=jnp.float32)
    loss5 = jax.block_until_ready(
        contrastive_loss(image5.astype(jnp.bfloat16),
                         text5.astype(jnp.bfloat16), tile_i=64, tile_j=128))
    ref5 = _reference(image5.astype(jnp.bfloat16), text5.astype(jnp.bfloat16))
    assert jnp.allclose(loss5, ref5, rtol=2e-2, atol=2e-2), (loss5, ref5)

    # Test 6: cast_to_bf16 fast path on f32 inputs (f32 diagonal kept).
    loss6 = jax.block_until_ready(
        contrastive_loss(image5, text5, cast_to_bf16=True))
    ref6 = _reference(image5, text5)
    assert jnp.allclose(loss6, ref6, rtol=3e-2, atol=3e-2), (loss6, ref6)

    print("KERNEL_OK")
</pallas_src>

<mosaic_0001>
module attributes {stable_mosaic.version = 11 : i64} {
  func.func @_maxviol_kernel(%arg0: i32, %arg1: i32, %arg2: memref<128x128xf32, #tpu.memory_space<vmem>>, %arg3: memref<128x128xf32, #tpu.memory_space<vmem>>, %arg4: memref<128x1xf32, #tpu.memory_space<vmem>>, %arg5: memref<1x128xf32, #tpu.memory_space<vmem>>, %arg6: memref<128x1xf32, #tpu.memory_space<vmem>>, %arg7: memref<1x1x128xf32, #tpu.memory_space<vmem>>, %arg8: memref<128x1xf32, #tpu.memory_space<vmem>>) attributes {dimension_semantics = [#tpu.dimension_semantics<parallel>, #tpu.dimension_semantics<arbitrary>], iteration_bounds = array<i64: 3, 3>, scalar_prefetch = 0 : i64, scratch_operands = 1 : i64, tpu.core_type = #tpu.core_type<tc>, window_params = [{transform_indices = @transform_0, window_bounds = array<i64: 128, 128>}, {transform_indices = @transform_1, window_bounds = array<i64: 128, 128>}, {transform_indices = @transform_2, window_bounds = array<i64: 128, 1>}, {transform_indices = @transform_3, window_bounds = array<i64: 1, 128>}, {transform_indices = @transform_4, window_bounds = array<i64: 128, 1>}, {transform_indices = @transform_5, window_bounds = array<i64: 1, 1, 128>}]} {
    %c0 = arith.constant 0 : index
    %c0_0 = arith.constant 0 : index
    %0 = vector.load %arg2[%c0, %c0_0] : memref<128x128xf32, #tpu.memory_space<vmem>>, vector<128x128xf32>
    %c0_1 = arith.constant 0 : index
    %c0_2 = arith.constant 0 : index
    %1 = vector.load %arg3[%c0_1, %c0_2] : memref<128x128xf32, #tpu.memory_space<vmem>>, vector<128x128xf32>
    %cst = arith.constant dense<0.000000e+00> : vector<128x128xf32>
    %2 = tpu.matmul %0, %1, %cst {dimension_numbers = #tpu.dot_dimension_numbers<[1], [1], [0], [0], [0, 0, 1, 0], [], []>} : vector<128x128xf32>, vector<128x128xf32>, vector<128x128xf32> -> vector<128x128xf32>
    %c0_3 = arith.constant 0 : index
    %c0_4 = arith.constant 0 : index
    %3 = vector.load %arg4[%c0_3, %c0_4] : memref<128x1xf32, #tpu.memory_space<vmem>>, vector<128x1xf32>
    %c0_5 = arith.constant 0 : index
    %c0_6 = arith.constant 0 : index
    %4 = vector.load %arg5[%c0_5, %c0_6] : memref<1x128xf32, #tpu.memory_space<vmem>>, vector<1x128xf32>
    %c128_i32 = arith.constant 128 : i32
    %5 = arith.muli %arg0, %c128_i32 : i32
    %6 = tpu.iota {dimensions = array<i32: 0>} : vector<128x1xi32>
    %7 = vector.broadcast %5 : i32 to vector<128x1xi32>
    %8 = arith.addi %7, %6 : vector<128x1xi32>
    %c128_i32_7 = arith.constant 128 : i32
    %9 = arith.muli %arg1, %c128_i32_7 : i32
    %10 = tpu.iota {dimensions = array<i32: 1>} : vector<1x128xi32>
    %11 = vector.broadcast %9 : i32 to vector<1x128xi32>
    %12 = arith.addi %11, %10 : vector<1x128xi32>
    %13 = vector.broadcast %8 : vector<128x1xi32> to vector<128x128xi32>
    %14 = vector.broadcast %12 : vector<1x128xi32> to vector<128x128xi32>
    %15 = arith.cmpi eq, %13, %14 : vector<128x128xi32>
    %c300_i32 = arith.constant 300 : i32
    %16 = vector.broadcast %c300_i32 : i32 to vector<128x1xi32>
    %17 = arith.cmpi sge, %8, %16 : vector<128x1xi32>
    %18 = vector.broadcast %17 : vector<128x1xi1> to vector<128x128xi1>
    %19 = arith.ori %15, %18 : vector<128x128xi1>
    %c300_i32_8 = arith.constant 300 : i32
    %20 = vector.broadcast %c300_i32_8 : i32 to vector<1x128xi32>
    %21 = arith.cmpi sge, %12, %20 : vector<1x128xi32>
    %22 = vector.broadcast %21 : vector<1x128xi1> to vector<128x128xi1>
    %23 = arith.ori %19, %22 : vector<128x128xi1>
    %cst_9 = arith.constant -1.000000e+30 : f32
    %24 = vector.broadcast %cst_9 : f32 to vector<128x128xf32>
    %25 = arith.select %23, %24, %2 : vector<128x128xi1>, vector<128x128xf32>
    %cst_10 = arith.constant 3.000000e-01 : f32
    %26 = vector.broadcast %cst_10 : f32 to vector<128x1xf32>
    %27 = arith.subf %26, %3 : vector<128x1xf32>
    %28 = vector.broadcast %27 : vector<128x1xf32> to vector<128x128xf32>
    %29 = arith.addf %25, %28 : vector<128x128xf32>
    %cst_11 = arith.constant 0.000000e+00 : f32
    %30 = vector.broadcast %cst_11 : f32 to vector<128x128xf32>
    %31 = arith.maximumf %29, %30 : vector<128x128xf32>
    %cst_12 = arith.constant 3.000000e-01 : f32
    %32 = vector.broadcast %cst_12 : f32 to vector<1x128xf32>
    %33 = arith.subf %32, %4 : vector<1x128xf32>
    %34 = vector.broadcast %33 : vector<1x128xf32> to vector<128x128xf32>
    %35 = arith.addf %25, %34 : vector<128x128xf32>
    %cst_13 = arith.constant 0.000000e+00 : f32
    %36 = vector.broadcast %cst_13 : f32 to vector<128x128xf32>
    %37 = arith.maximumf %35, %36 : vector<128x128xf32>
    %cst_14 = arith.constant dense<0xFF800000> : vector<128xf32>
    %38 = vector.multi_reduction <maximumf>, %37, %cst_14 [0] : vector<128x128xf32> to vector<128xf32>
    %39 = vector.shape_cast %38 : vector<128xf32> to vector<1x128xf32>
    %c0_15 = arith.constant 0 : index
    %c0_16 = arith.constant 0 : index
    %c0_17 = arith.constant 0 : index
    %40 = vector.load %arg7[%c0_15, %c0_16, %c0_17] : memref<1x1x128xf32, #tpu.memory_space<vmem>>, vector<1x1x128xf32>
    %41 = vector.shape_cast %40 : vector<1x1x128xf32> to vector<1x128xf32>
    %42 = vector.shape_cast %39 : vector<1x128xf32> to vector<1x1x128xf32>
    tpu.vector_store %arg7[%c0_15, %c0_16, %c0_17], %42 {strides = array<i32>} : memref<1x1x128xf32, #tpu.memory_space<vmem>>, vector<1x1x128xf32>,
    %cst_18 = arith.constant dense<0xFF800000> : vector<128xf32>
    %43 = vector.multi_reduction <maximumf>, %31, %cst_18 [1] : vector<128x128xf32> to vector<128xf32>
    %44 = vector.shape_cast %43 : vector<128xf32> to vector<128x1xf32>
    %c0_i32 = arith.constant 0 : i32
    %45 = arith.cmpi eq, %arg1, %c0_i32 : i32
    %46 = arith.extui %45 : i1 to i32
    %c0_i32_19 = arith.constant 0 : i32
    %47 = arith.cmpi ne, %46, %c0_i32_19 : i32
    scf.if %47 {
      %c0_23 = arith.constant 0 : index
      %c0_24 = arith.constant 0 : index
      %54 = vector.load %arg8[%c0_23, %c0_24] : memref<128x1xf32, #tpu.memory_space<vmem>>, vector<128x1xf32>
      tpu.vector_store %arg8[%c0_23, %c0_24], %44 {strides = array<i32>} : memref<128x1xf32, #tpu.memory_space<vmem>>, vector<128x1xf32>,
    } else {
    }
    %c0_i32_20 = arith.constant 0 : i32
    %48 = arith.cmpi sgt, %arg1, %c0_i32_20 : i32
    %49 = arith.extui %48 : i1 to i32
    %c0_i32_21 = arith.constant 0 : i32
    %50 = arith.cmpi ne, %49, %c0_i32_21 : i32
    scf.if %50 {
      %c0_23 = arith.constant 0 : index
      %c0_24 = arith.constant 0 : index
      %54 = vector.load %arg8[%c0_23, %c0_24] : memref<128x1xf32, #tpu.memory_space<vmem>>, vector<128x1xf32>
      %55 = arith.maximumf %54, %44 : vector<128x1xf32>
      %c0_25 = arith.constant 0 : index
      %c0_26 = arith.constant 0 : index
      %56 = vector.load %arg8[%c0_25, %c0_26] : memref<128x1xf32, #tpu.memory_space<vmem>>, vector<128x1xf32>
      tpu.vector_store %arg8[%c0_25, %c0_26], %55 {strides = array<i32>} : memref<128x1xf32, #tpu.memory_space<vmem>>, vector<128x1xf32>,
    } else {
    }
    %c2_i32 = arith.constant 2 : i32
    %51 = arith.cmpi eq, %arg1, %c2_i32 : i32
    %52 = arith.extui %51 : i1 to i32
    %c0_i32_22 = arith.constant 0 : i32
    %53 = arith.cmpi ne, %52, %c0_i32_22 : i32
    scf.if %53 {
      %c0_23 = arith.constant 0 : index
      %c0_24 = arith.constant 0 : index
      %54 = vector.load %arg8[%c0_23, %c0_24] : memref<128x1xf32, #tpu.memory_space<vmem>>, vector<128x1xf32>
      %c0_25 = arith.constant 0 : index
      %c0_26 = arith.constant 0 : index
      %55 = vector.load %arg6[%c0_25, %c0_26] : memref<128x1xf32, #tpu.memory_space<vmem>>, vector<128x1xf32>
      tpu.vector_store %arg6[%c0_25, %c0_26], %54 {strides = array<i32>} : memref<128x1xf32, #tpu.memory_space<vmem>>, vector<128x1xf32>,
    } else {
    }
    return
  }
  func.func @transform_0(%arg0: i32, %arg1: i32) -> (i32, i32) {
    %c0_i32 = arith.constant 0 : i32
    %c0_i32_0 = arith.constant 0 : i32
    return %arg0, %c0_i32 : i32, i32
  }
  func.func @transform_1(%arg0: i32, %arg1: i32) -> (i32, i32) {
    %c0_i32 = arith.constant 0 : i32
    %c0_i32_0 = arith.constant 0 : i32
    return %arg1, %c0_i32 : i32, i32
  }
  func.func @transform_2(%arg0: i32, %arg1: i32) -> (i32, i32) {
    %c0_i32 = arith.constant 0 : i32
    %c0_i32_0 = arith.constant 0 : i32
    return %arg0, %c0_i32 : i32, i32
  }
  func.func @transform_3(%arg0: i32, %arg1: i32) -> (i32, i32) {
    %c0_i32 = arith.constant 0 : i32
    %c0_i32_0 = arith.constant 0 : i32
    return %c0_i32, %arg1 : i32, i32
  }
  func.func @transform_4(%arg0: i32, %arg1: i32) -> (i32, i32) {
    %c0_i32 = arith.constant 0 : i32
    %c0_i32_0 = arith.constant 0 : i32
    return %arg0, %c0_i32 : i32, i32
  }
  func.func @transform_5(%arg0: i32, %arg1: i32) -> (i32, i32, i32) {
    %c0_i32 = arith.constant 0 : i32
    %c0_i32_0 = arith.constant 0 : i32
    return %arg0, %c0_i32, %arg1 : i32, i32, i32
  }
}

</mosaic_0001>

<llo_original>
// kernel: tpu_custom_call.1
$region0: #{tpu_custom_call.1}
  #allocation0 [shape = 'u32[]', space=smem, size = 0x4, offset = 0x4, fixed_abs, tag = 'smem constant byte address 0x4 - core index']
  #allocation1 [shape = 'u32[144,128]{1,0:T(1,128)}', space=vmem, size = 0x12000, scoped, tag = 'internal scratch']
  #allocation2 [shape = 'f32[128,1]{1,0:T(8,128)}', space=vmem, size = 0x10000, scoped, tag = 'scratch operand']
  %s0 = inlined_call_operand.vmem [shape: f32[384,128], index: 0, kind: input, shape index: {}]
  %s1 = inlined_call_operand.hbm [shape: f32[384,128], index: 1, kind: input, shape index: {}]
  %s2 = inlined_call_operand.vmem [shape: f32[384,1], index: 2, kind: input, shape index: {}]
  %s3 = inlined_call_operand.vmem [shape: f32[1,384], index: 3, kind: input, shape index: {}]
  %s4 = inlined_call_operand.vmem [shape: f32[384,1], index: 4, kind: output, shape index: {0}]
  %s5 = inlined_call_operand.hbm [shape: f32[3,1,384], index: 5, kind: output, shape index: {1}]
  %6 = xla_tuple %s4, %s5
  %s7 = sld [smem:[#allocation0]]
  $region73: #{tpu_custom_call.1} parent=0
    _
  %s9 = ssub.s32 1, %s7
  %s10 = scalar_select 0, %s9, %s7
  $region1: #{tpu_custom_call.1} parent=0
    #allocation3 [shape = 'u8[131072]{0}', space=vmem, size = 0x20000, scoped, tag = 'input window, operand 1']
    #allocation4 [shape = 's32[2]{0}', space=sflag, size = 0x8, scoped, tag = 'scoped memory for tpu_custom_call.1']
    #allocation5 [shape = 's32[2]{0}', space=sflag, size = 0x8, scoped, tag = 'scoped memory for tpu_custom_call.1']
    #allocation6 [shape = 'u8[1024]{0}', space=vmem, size = 0x400, scoped, tag = 'output window, operand 1']
    %11 = vsyncpa [#allocation4], 0
    %s12 = scalar_lea.sflag [#allocation4], 1
    %13 = vsyncpa %s12, 0
    %14 = vsyncpa [#allocation5], 0
    %s15 = scalar_lea.sflag [#allocation5], 1
    %16 = vsyncpa %s15, 0
    loop: start=0, step=1, limit=11
    $region2: #{tpu_custom_call.1} parent=1 // loop_pre_header
      _
    $region3: #{tpu_custom_call.1} parent=1 // loop_header
      %s18 = sphi 0, %s22
      %p19 = scmp.ge.s32.totalorder %s18, 11
      %s25 = sphi 0, %s37
      %s26 = sphi 0, %s33
      %s27 = sphi 0, %s25
      %s28 = sphi 0, %s26
      %s29 = sphi 0, %s27
      %s30 = sphi 0, %s28
      %s40 = sphi 0, %s42
      %s43 = sphi 0, %s40
      %s44 = sphi 0, %s43
      %s60 = sphi 0, %s44
      %s66 = sphi 0, %s68
      %s69 = sphi 0, %s66
      %s70 = sphi 0, %s69
      %s86 = sphi 0, %s70
      %s92 = sphi 0, %s94
      %s95 = sphi 0, %s92
      %s96 = sphi 0, %s95
      %s112 = sphi 0, %s96
      %s118 = sphi 0, %s120
      %s121 = sphi 0, %s118
      %s122 = sphi 0, %s121
      %s138 = sphi 0, %s122
      %s144 = sphi 0, %s146
      %s147 = sphi 0, %s144
      %s148 = sphi 0, %s147
      %s164 = sphi 0, %s148
      %s172 = sphi 0, %s174
      %s175 = sphi 0, %s172
      %s176 = sphi 0, %s175
      %s192 = sphi 0, %s176
    $region4: #{tpu_custom_call.1} parent=1 // loop_header_branch
      %21 = sbr.rel (%p19) target = $region8
    $region5: #{tpu_custom_call.1} parent=1 // loop_body
      %s23 = ssub.s32 %s18, 1
      %s24 = ssub.s32 %s18, 2
      %s31 = sadd.s32 1, %s26
      %p32 = scmp.ge.s32.totalorder %s31, 3
      %s33 = scalar_select %p32, 0, %s31
      %s34 = sadd.s32 1, %s25
      %s35 = scalar_select %p32, %s34, %s25
      %p36 = scmp.ge.s32.totalorder %s35, 3
      %s37 = scalar_select %p36, 0, %s35
      %s38 = ssub.s32 %s25, %s37
      %p39 = scmp.eq.s32.totalorder %s38, 0
      %s41 = sadd.s32 %s40, 1
      %s42 = scalar_select %p39, %s40, %s41
      %p45 = pneg %p39
      %p46 = scmp.eq.s32.totalorder %s18, 8
      %p47 = por %p45, %p46
      %p48 = scmp.ne.s32.totalorder %s40, %s43
      %p49 = scmp.eq.s32.totalorder %s18, 0
      %p50 = por %p48, %p49
      %p51 = scmp.ne.s32.totalorder %s40, %s43
      %p52 = scmp.eq.s32.totalorder %s23, 8
      %p53 = por %p51, %p52
      %p54 = scmp.ne.s32.totalorder %s43, %s44
      %p55 = scmp.eq.s32.totalorder %s23, 0
      %p56 = por %p54, %p55
      %p57 = scmp.ne.s32.totalorder %s43, %s44
      %p58 = scmp.eq.s32.totalorder %s24, 8
      %p59 = por %p57, %p58
      %p61 = scmp.ne.s32.totalorder %s44, %s60
      %p62 = scmp.eq.s32.totalorder %s24, 0
      %p63 = por %p61, %p62
      %s64 = ssub.s32 %s26, %s33
      %p65 = scmp.eq.s32.totalorder %s64, 0
      %s67 = sadd.s32 %s66, 1
      %s68 = scalar_select %p65, %s66, %s67
      %p71 = pneg %p65
      %p72 = scmp.eq.s32.totalorder %s18, 8
      %p73 = por %p71, %p72
      %p74 = scmp.ne.s32.totalorder %s66, %s69
      %p75 = scmp.eq.s32.totalorder %s18, 0
      %p76 = por %p74, %p75
      %p77 = scmp.ne.s32.totalorder %s66, %s69
      %p78 = scmp.eq.s32.totalorder %s23, 8
      %p79 = por %p77, %p78
      %p80 = scmp.ne.s32.totalorder %s69, %s70
      %p81 = scmp.eq.s32.totalorder %s23, 0
      %p82 = por %p80, %p81
      %p83 = scmp.ne.s32.totalorder %s69, %s70
      %p84 = scmp.eq.s32.totalorder %s24, 8
      %p85 = por %p83, %p84
      %p87 = scmp.ne.s32.totalorder %s70, %s86
      %p88 = scmp.eq.s32.totalorder %s24, 0
      %p89 = por %p87, %p88
      %s90 = ssub.s32 %s25, %s37
      %p91 = scmp.eq.s32.totalorder %s90, 0
      %s93 = sadd.s32 %s92, 1
      %s94 = scalar_select %p91, %s92, %s93
      %p97 = pneg %p91
      %p98 = scmp.eq.s32.totalorder %s18, 8
      %p99 = por %p97, %p98
      %p100 = scmp.ne.s32.totalorder %s92, %s95
      %p101 = scmp.eq.s32.totalorder %s18, 0
      %p102 = por %p100, %p101
      %p103 = scmp.ne.s32.totalorder %s92, %s95
      %p104 = scmp.eq.s32.totalorder %s23, 8
      %p105 = por %p103, %p104
      %p106 = scmp.ne.s32.totalorder %s95, %s96
      %p107 = scmp.eq.s32.totalorder %s23, 0
      %p108 = por %p106, %p107
      %p109 = scmp.ne.s32.totalorder %s95, %s96
      %p110 = scmp.eq.s32.totalorder %s24, 8
      %p111 = por %p109, %p110
      %p113 = scmp.ne.s32.totalorder %s96, %s112
      %p114 = scmp.eq.s32.totalorder %s24, 0
      %p115 = por %p113, %p114
      %s116 = ssub.s32 %s26, %s33
      %p117 = scmp.eq.s32.totalorder %s116, 0
      %s119 = sadd.s32 %s118, 1
      %s120 = scalar_select %p117, %s118, %s119
      %p123 = pneg %p117
      %p124 = scmp.eq.s32.totalorder %s18, 8
      %p125 = por %p123, %p124
      %p126 = scmp.ne.s32.totalorder %s118, %s121
      %p127 = scmp.eq.s32.totalorder %s18, 0
      %p128 = por %p126, %p127
      %p129 = scmp.ne.s32.totalorder %s118, %s121
      %p130 = scmp.eq.s32.totalorder %s23, 8
      %p131 = por %p129, %p130
      %p132 = scmp.ne.s32.totalorder %s121, %s122
      %p133 = scmp.eq.s32.totalorder %s23, 0
      %p134 = por %p132, %p133
      %p135 = scmp.ne.s32.totalorder %s121, %s122
      %p136 = scmp.eq.s32.totalorder %s24, 8
      %p137 = por %p135, %p136
      %p139 = scmp.ne.s32.totalorder %s122, %s138
      %p140 = scmp.eq.s32.totalorder %s24, 0
      %p141 = por %p139, %p140
      %s142 = ssub.s32 %s25, %s37
      %p143 = scmp.eq.s32.totalorder %s142, 0
      %s145 = sadd.s32 %s144, 1
      %s146 = scalar_select %p143, %s144, %s145
      %p149 = pneg %p143
      %p150 = scmp.eq.s32.totalorder %s18, 8
      %p151 = por %p149, %p150
      %p152 = scmp.ne.s32.totalorder %s144, %s147
      %p153 = scmp.eq.s32.totalorder %s18, 0
      %p154 = por %p152, %p153
      %p155 = scmp.ne.s32.totalorder %s144, %s147
      %p156 = scmp.eq.s32.totalorder %s23, 8
      %p157 = por %p155, %p156
      %p158 = scmp.ne.s32.totalorder %s147, %s148
      %p159 = scmp.eq.s32.totalorder %s23, 0
      %p160 = por %p158, %p159
      %p161 = scmp.ne.s32.totalorder %s147, %s148
      %p162 = scmp.eq.s32.totalorder %s24, 8
      %p163 = por %p161, %p162
      %p165 = scmp.ne.s32.totalorder %s148, %s164
      %p166 = scmp.eq.s32.totalorder %s24, 0
      %p167 = por %p165, %p166
      %s168 = ssub.s32 %s25, %s37
      %s169 = ssub.s32 %s26, %s33
      %s170 = sor.u32 %s168, %s169
      %p171 = scmp.eq.s32.totalorder %s170, 0
      %s173 = sadd.s32 %s172, 1
      %s174 = scalar_select %p171, %s172, %s173
      %p177 = pneg %p171
      %p178 = scmp.eq.s32.totalorder %s18, 8
      %p179 = por %p177, %p178
      %p180 = scmp.ne.s32.totalorder %s172, %s175
      %p181 = scmp.eq.s32.totalorder %s18, 0
      %p182 = por %p180, %p181
      %p183 = scmp.ne.s32.totalorder %s172, %s175
      %p184 = scmp.eq.s32.totalorder %s23, 8
      %p185 = por %p183, %p184
      %p186 = scmp.ne.s32.totalorder %s175, %s176
      %p187 = scmp.eq.s32.totalorder %s23, 0
      %p188 = por %p186, %p187
      %p189 = scmp.ne.s32.totalorder %s175, %s176
      %p190 = scmp.eq.s32.totalorder %s24, 8
      %p191 = por %p189, %p190
      %p193 = scmp.ne.s32.totalorder %s176, %s192
      %p194 = scmp.eq.s32.totalorder %s24, 0
      %p195 = por %p193, %p194
      %p196 = scmp.le.s32.totalorder 1, %s18
      %p197 = scmp.lt.s32.totalorder %s18, 10
      %p198 = pnand %p196, %p197
      %p199 = pneg %p198
      // Predicated region
      $region9: #{tpu_custom_call.1} parent=5 // pred_check
        _
      $region10: #{tpu_custom_call.1} parent=5 // pred_check_branch
        %201 = sbr.rel (%p198) target = $region12
      $region11: #{tpu_custom_call.1} parent=5 // pred_region
        %s202 = ssub.s32 %s18, 1
      $region12: #{tpu_custom_call.1} parent=5 // pred_fallthru
        _
      %p203 = scmp.lt.s32.totalorder %s18, 9
      // Predicated region
      $region13: #{tpu_custom_call.1} parent=5 // pred_check
        %p204 = pneg %p203
      $region14: #{tpu_custom_call.1} parent=5 // pred_check_branch
        %206 = sbr.rel (%p204) target = $region16
      $region15: #{tpu_custom_call.1} parent=5 // pred_region
        // Predicated region
        $region17: #{tpu_custom_call.1} parent=15 // pred_check
          %p207 = pneg %p50
        $region18: #{tpu_custom_call.1} parent=15 // pred_check_branch
          %209 = sbr.rel (%p207) target = $region20
        $region19: #{tpu_custom_call.1} parent=15 // pred_region
          %s210 = smul.u32 16, %s25
          %p211 = scmp.lt.s32.totalorder %s210, 47
          %s212 = scalar_select %p211, %s210, 47
          %s213 = smul.addr %s212, 8
          %s214 = scalar_lea.vmem %s0, %s213
          %s215 = smul.u32 16, %s25
        $region20: #{tpu_custom_call.1} parent=15 // pred_fallthru
          _
        // Predicated region
        $region21: #{tpu_custom_call.1} parent=15 // pred_check
          %p216 = pneg %p76
        $region22: #{tpu_custom_call.1} parent=15 // pred_check_branch
          %218 = sbr.rel (%p216) target = $region24
        $region23: #{tpu_custom_call.1} parent=15 // pred_region
          %s219 = sand.u32 %s66, 1
          %s220 = scalar_lea.sflag [#allocation4], %s219
          %s221 = sand.u32 %s66, 1
          %s222 = smul.addr %s221, 128
          %s223 = scalar_lea.vmem [#allocation3], %s222
          %s224 = smul.u32 16, %s26
          %s226 = ssub.s32 2048, 2048
          %227 = vsyncadd %s220, %s226
          %s228 = smul.addr %s224, 128
          %s229 = scalar_lea.hbm %s1, %s228
          %s230 = sshll.u32 %s223, 4
          %s231 = int_to_ptr.vmem [resolvable:$true] %s230
          %236 = dma.hbm_to_vmem [thread:$0]  %s229, 2048, %s231, %s220, 128, 128, 8
        $region24: #{tpu_custom_call.1} parent=15 // pred_fallthru
          _
        // Predicated region
        $region25: #{tpu_custom_call.1} parent=15 // pred_check
          %p237 = pneg %p102
        $region26: #{tpu_custom_call.1} parent=15 // pred_check_branch
          %239 = sbr.rel (%p237) target = $region28
        $region27: #{tpu_custom_call.1} parent=15 // pred_region
          %s240 = smul.u32 16, %s25
          %p241 = scmp.lt.s32.totalorder %s240, 47
          %s242 = scalar_select %p241, %s240, 47
          %s243 = smul.addr %s242, 8
          %s244 = scalar_lea.vmem %s2, %s243
          %s245 = smul.u32 16, %s25
        $region28: #{tpu_custom_call.1} parent=15 // pred_fallthru
          _
        // Predicated region
        $region29: #{tpu_custom_call.1} parent=15 // pred_check
          %p246 = pneg %p128
        $region30: #{tpu_custom_call.1} parent=15 // pred_check_branch
          %248 = sbr.rel (%p246) target = $region32
        $region31: #{tpu_custom_call.1} parent=15 // pred_region
          %p249 = scmp.lt.s32.totalorder %s26, 2
          %s250 = scalar_select %p249, %s26, 2
          %s251 = scalar_lea.vmem %s3, %s250
        $region32: #{tpu_custom_call.1} parent=15 // pred_fallthru
          _
      $region16: #{tpu_custom_call.1} parent=5 // pred_fallthru
        _
      %p252 = scmp.le.s32.totalorder 1, %s18
      %p253 = scmp.lt.s32.totalorder %s18, 10
      %p254 = pnand %p252, %p253
      %p255 = pneg %p254
      // Predicated region
      $region33: #{tpu_custom_call.1} parent=5 // pred_check
        _
      $region34: #{tpu_custom_call.1} parent=5 // pred_check_branch
        %257 = sbr.rel (%p254) target = $region36
      $region35: #{tpu_custom_call.1} parent=5 // pred_region
        %s258 = ssub.s32 %s18, 1
        %s259 = sand.u32 %s69, 1
        %s260 = scalar_lea.sflag [#allocation4], %s259
        %s261 = sand.u32 %s69, 1
        %s262 = smul.addr %s261, 128
        %s263 = scalar_lea.vmem [#allocation3], %s262
        // Predicated region
        $region37: #{tpu_custom_call.1} parent=35 // pred_check
          %p264 = pneg %p82
        $region38: #{tpu_custom_call.1} parent=35 // pred_check_branch
          %266 = sbr.rel (%p264) target = $region40
        $region39: #{tpu_custom_call.1} parent=35 // pred_region
          %267 = dma.done %s260, 2048
        $region40: #{tpu_custom_call.1} parent=35 // pred_fallthru
          _
        %s268 = smul.u32 16, %s27
        %p269 = scmp.lt.s32.totalorder %s268, 47
        %s270 = scalar_select %p269, %s268, 47
        %s271 = smul.addr %s270, 8
        %s272 = scalar_lea.vmem %s0, %s271
        %p273 = pneg %p56
        %p274 = pneg %p53
        %s275 = sand.u32 %s69, 1
        %s276 = scalar_lea.sflag [#allocation4], %s275
        %s277 = sand.u32 %s69, 1
        %s278 = smul.addr %s277, 128
        %s279 = scalar_lea.vmem [#allocation3], %s278
        %p280 = pneg %p82
        %p281 = pneg %p79
        %s282 = smul.u32 16, %s27
        %p283 = scmp.lt.s32.totalorder %s282, 47
        %s284 = scalar_select %p283, %s282, 47
        %s285 = smul.addr %s284, 8
        %s286 = scalar_lea.vmem %s2, %s285
        %p287 = pneg %p108
        %p288 = pneg %p105
        %p289 = scmp.lt.s32.totalorder %s28, 2
        %s290 = scalar_select %p289, %s28, 2
        %s291 = scalar_lea.vmem %s3, %s290
        %p292 = pneg %p134
        %p293 = pneg %p131
        %p294 = pneg %p160
        %p295 = pneg %p157
        %s296 = smul.u32 16, %s27
        %p297 = scmp.lt.s32.totalorder %s296, 47
        %s298 = scalar_select %p297, %s296, 47
        %s299 = smul.addr %s298, 8
        %s300 = scalar_lea.vmem %s4, %s299
        %p301 = pneg %p188
        %p302 = pneg %p185
        %s303 = sand.u32 %s175, 1
        %s304 = scalar_lea.sflag [#allocation5], %s303
        %s305 = sand.u32 %s175, 1
        %s306 = scalar_lea.vmem [#allocation6], %s305
        %s307 = smul.u32 16, %s27
        %p308 = scmp.lt.s32.totalorder %s307, 47
        %s309 = scalar_select %p308, %s307, 47
        %s310 = smul.addr %s309, 8
        %s311 = scalar_lea.vmem %s0, %s310
        %s312 = smul.u32 16, %s27
        %s313 = smul.u32 16, %s28
        %s314 = smul.u32 16, %s27
        %p315 = scmp.lt.s32.totalorder %s314, 47
        %s316 = scalar_select %p315, %s314, 47
        %s317 = smul.addr %s316, 8
        %s318 = scalar_lea.vmem %s2, %s317
        %s319 = smul.u32 16, %s27
        %p320 = scmp.lt.s32.totalorder %s28, 2
        %s321 = scalar_select %p320, %s28, 2
        %s322 = scalar_lea.vmem %s3, %s321
        %s323 = smul.u32 16, %s27
        %p324 = scmp.lt.s32.totalorder %s323, 47
        %s325 = scalar_select %p324, %s323, 47
        %s326 = smul.addr %s325, 8
        %s327 = scalar_lea.vmem %s4, %s326
        %s328 = smul.u32 16, %s27
        %v329 = vld [vmem:[%s311] sm:$0xff]
        %v330 = vld [vmem:[%s311 + $0x8] sm:$0xff]
        %v331 = vld [vmem:[%s311 + $0x10] sm:$0xff]
        %v332 = vld [vmem:[%s311 + $0x18] sm:$0xff]
        %v333 = vld [vmem:[%s311 + $0x20] sm:$0xff]
        %v334 = vld [vmem:[%s311 + $0x28] sm:$0xff]
        %v335 = vld [vmem:[%s311 + $0x30] sm:$0xff]
        %v336 = vld [vmem:[%s311 + $0x38] sm:$0xff]
        %v337 = vld [vmem:[%s311 + $0x40] sm:$0xff]
        %v338 = vld [vmem:[%s311 + $0x48] sm:$0xff]
        %v339 = vld [vmem:[%s311 + $0x50] sm:$0xff]
        %v340 = vld [vmem:[%s311 + $0x58] sm:$0xff]
        %v341 = vld [vmem:[%s311 + $0x60] sm:$0xff]
        %v342 = vld [vmem:[%s311 + $0x68] sm:$0xff]
        %v343 = vld [vmem:[%s311 + $0x70] sm:$0xff]
        %v344 = vld [vmem:[%s311 + $0x78] sm:$0xff]
        %v345 = vld [vmem:[%s263] sm:$0xff]
        %v346 = vld [vmem:[%s263 + $0x8] sm:$0xff]
        %v347 = vld [vmem:[%s263 + $0x10] sm:$0xff]
        %v348 = vld [vmem:[%s263 + $0x18] sm:$0xff]
        %v349 = vld [vmem:[%s263 + $0x20] sm:$0xff]
        %v350 = vld [vmem:[%s263 + $0x28] sm:$0xff]
        %v351 = vld [vmem:[%s263 + $0x30] sm:$0xff]
        %v352 = vld [vmem:[%s263 + $0x38] sm:$0xff]
        %v353 = vld [vmem:[%s263 + $0x40] sm:$0xff]
        %v354 = vld [vmem:[%s263 + $0x48] sm:$0xff]
        %v355 = vld [vmem:[%s263 + $0x50] sm:$0xff]
        %v356 = vld [vmem:[%s263 + $0x58] sm:$0xff]
        %v357 = vld [vmem:[%s263 + $0x60] sm:$0xff]
        %v358 = vld [vmem:[%s263 + $0x68] sm:$0xff]
        %v359 = vld [vmem:[%s263 + $0x70] sm:$0xff]
        %v360 = vld [vmem:[%s263 + $0x78] sm:$0xff]
        %361 = vmatprep.subr.mxu0 0.0
        %362 = vmatpush1.xpose.msra.mxu0 %v345
        %363 = vmatprep.subr.mxu0 0.0
        %364 = vmatpush1.xpose.msra.mxu0 %v346
        %365 = vmatprep.subr.mxu0 0.0
        %366 = vmatpush1.xpose.msra.mxu0 %v347
        %367 = vmatprep.subr.mxu0 0.0
        %368 = vmatpush1.xpose.msra.mxu0 %v348
        %369 = vmatprep.subr.mxu0 0.0
        %370 = vmatpush1.xpose.msra.mxu0 %v349
        %371 = vmatprep.subr.mxu0 0.0
        %372 = vmatpush1.xpose.msra.mxu0 %v350
        %373 = vmatprep.subr.mxu0 0.0
        %374 = vmatpush1.xpose.msra.mxu0 %v351
        %375 = vmatprep.subr.mxu0 0.0
        %376 = vmatpush1.xpose.msra.mxu0 %v352
        %377 = vmatprep.subr.mxu0 0.0
        %378 = vmatpush1.xpose.msra.mxu0 %v353
        %379 = vmatprep.subr.mxu0 0.0
        %380 = vmatpush1.xpose.msra.mxu0 %v354
        %381 = vmatprep.subr.mxu0 0.0
        %382 = vmatpush1.xpose.msra.mxu0 %v355
        %383 = vmatprep.subr.mxu0 0.0
        %384 = vmatpush1.xpose.msra.mxu0 %v356
        %385 = vmatprep.subr.mxu0 0.0
        %386 = vmatpush1.xpose.msra.mxu0 %v357
        %387 = vmatprep.subr.mxu0 0.0
        %388 = vmatpush1.xpose.msra.mxu0 %v358
        %389 = vmatprep.subr.mxu0 0.0
        %390 = vmatpush1.xpose.msra.mxu0 %v359
        %391 = vmatprep.subr.mxu0 0.0
        %392 = vmatpush1.xpose.msra.mxu0 %v360
        %393 = vmatprep.subr.mxu0 0.0
        %394 = vmatpush1.xpose.msra.mxu0 0.0
        %395 = vmatprep.subr.mxu0 0.0
        %396 = vmatpush1.xpose.msra.mxu0 0.0
        %397 = vmatprep.subr.mxu0 0.0
        %398 = vmatpush1.xpose.msra.mxu0 0.0
        %399 = vmatprep.subr.mxu0 0.0
        %400 = vmatpush1.xpose.msra.mxu0 0.0
        %401 = vmatprep.subr.mxu0 0.0
        %402 = vmatpush1.xpose.msra.mxu0 0.0
        %403 = vmatprep.subr.mxu0 0.0
        %404 = vmatpush1.xpose.msra.mxu0 0.0
        %405 = vmatprep.subr.mxu0 0.0
        %406 = vmatpush1.xpose.msra.mxu0 0.0
        %407 = vmatprep.subr.mxu0 0.0
        %408 = vmatpush1.xpose.msra.mxu0 0.0
        %409 = vmatprep.subr.mxu0 0.0
        %410 = vmatpush1.xpose.msra.mxu0 0.0
        %411 = vmatprep.subr.mxu0 0.0
        %412 = vmatpush1.xpose.msra.mxu0 0.0
        %413 = vmatprep.subr.mxu0 0.0
        %414 = vmatpush1.xpose.msra.mxu0 0.0
        %415 = vmatprep.subr.mxu0 0.0
        %416 = vmatpush1.xpose.msra.mxu0 0.0
        %417 = vmatprep.subr.mxu0 0.0
        %418 = vmatpush1.xpose.msra.mxu0 0.0
        %419 = vmatprep.subr.mxu0 0.0
        %420 = vmatpush1.xpose.msra.mxu0 0.0
        %421 = vmatprep.subr.mxu0 0.0
        %422 = vmatpush1.xpose.msra.mxu0 0.0
        %423 = vmatprep.subr.mxu0 0.0
        %424 = vmatpush1.xpose.msra.mxu0 0.0
        %425 = vmatprep.mubr.f32.mxu0 0.0
        %426 = vmatmul.mubr.f32.gmra.mrb[0].mxu0 %v329
        %v427 = vpop.f32.mrb[0].mxu0
        %v428 = vadd.f32 0.0, %v427
        %v429 = vpop.f32.mrb[0].mxu0
        %430 = vmatprep.mubr.f32.mxu0 0.0
        %431 = vmatmul.mubr.f32.gmra.mrb[0].mxu0 %v330
        %v432 = vpop.f32.mrb[0].mxu0
        %v433 = vadd.f32 0.0, %v432
        %v434 = vpop.f32.mrb[0].mxu0
        %435 = vmatprep.mubr.f32.mxu0 0.0
        %436 = vmatmul.mubr.f32.gmra.mrb[0].mxu0 %v331
        %v437 = vpop.f32.mrb[0].mxu0
        %v438 = vadd.f32 0.0, %v437
        %v439 = vpop.f32.mrb[0].mxu0
        %440 = vmatprep.mubr.f32.mxu0 0.0
        %441 = vmatmul.mubr.f32.gmra.mrb[0].mxu0 %v332
        %v442 = vpop.f32.mrb[0].mxu0
        %v443 = vadd.f32 0.0, %v442
        %v444 = vpop.f32.mrb[0].mxu0
        %445 = vmatprep.mubr.f32.mxu0 0.0
        %446 = vmatmul.mubr.f32.gmra.mrb[0].mxu0 %v333
        %v447 = vpop.f32.mrb[0].mxu0
        %v448 = vadd.f32 0.0, %v447
        %v449 = vpop.f32.mrb[0].mxu0
        %450 = vmatprep.mubr.f32.mxu0 0.0
        %451 = vmatmul.mubr.f32.gmra.mrb[0].mxu0 %v334
        %v452 = vpop.f32.mrb[0].mxu0
        %v453 = vadd.f32 0.0, %v452
        %v454 = vpop.f32.mrb[0].mxu0
        %455 = vmatprep.mubr.f32.mxu0 0.0
        %456 = vmatmul.mubr.f32.gmra.mrb[0].mxu0 %v335
        %v457 = vpop.f32.mrb[0].mxu0
        %v458 = vadd.f32 0.0, %v457
        %v459 = vpop.f32.mrb[0].mxu0
        %460 = vmatprep.mubr.f32.mxu0 0.0
        %461 = vmatmul.mubr.f32.gmra.mrb[0].mxu0 %v336
        %v462 = vpop.f32.mrb[0].mxu0
        %v463 = vadd.f32 0.0, %v462
        %v464 = vpop.f32.mrb[0].mxu0
        %465 = vmatprep.mubr.f32.mxu0 0.0
        %466 = vmatmul.mubr.f32.gmra.mrb[0].mxu0 %v337
        %v467 = vpop.f32.mrb[0].mxu0
        %v468 = vadd.f32 0.0, %v467
        %v469 = vpop.f32.mrb[0].mxu0
        %470 = vmatprep.mubr.f32.mxu0 0.0
        %471 = vmatmul.mubr.f32.gmra.mrb[0].mxu0 %v338
        %v472 = vpop.f32.mrb[0].mxu0
        %v473 = vadd.f32 0.0, %v472
        %v474 = vpop.f32.mrb[0].mxu0
        %475 = vmatprep.mubr.f32.mxu0 0.0
        %476 = vmatmul.mubr.f32.gmra.mrb[0].mxu0 %v339
        %v477 = vpop.f32.mrb[0].mxu0
        %v478 = vadd.f32 0.0, %v477
        %v479 = vpop.f32.mrb[0].mxu0
        %480 = vmatprep.mubr.f32.mxu0 0.0
        %481 = vmatmul.mubr.f32.gmra.mrb[0].mxu0 %v340
        %v482 = vpop.f32.mrb[0].mxu0
        %v483 = vadd.f32 0.0, %v482
        %v484 = vpop.f32.mrb[0].mxu0
        %485 = vmatprep.mubr.f32.mxu0 0.0
        %486 = vmatmul.mubr.f32.gmra.mrb[0].mxu0 %v341
        %v487 = vpop.f32.mrb[0].mxu0
        %v488 = vadd.f32 0.0, %v487
        %v489 = vpop.f32.mrb[0].mxu0
        %490 = vmatprep.mubr.f32.mxu0 0.0
        %491 = vmatmul.mubr.f32.gmra.mrb[0].mxu0 %v342
        %v492 = vpop.f32.mrb[0].mxu0
        %v493 = vadd.f32 0.0, %v492
        %v494 = vpop.f32.mrb[0].mxu0
        %495 = vmatprep.mubr.f32.mxu0 0.0
        %496 = vmatmul.mubr.f32.gmra.mrb[0].mxu0 %v343
        %v497 = vpop.f32.mrb[0].mxu0
        %v498 = vadd.f32 0.0, %v497
        %v499 = vpop.f32.mrb[0].mxu0
        %500 = vmatprep.mubr.f32.mxu0 0.0
        %501 = vmatmul.mubr.f32.gmra.mrb[0].mxu0 %v344
        %v502 = vpop.f32.mrb[0].mxu0
        %v503 = vadd.f32 0.0, %v502
        %v504 = vpop.f32.mrb[0].mxu0
        %505 = vdwg.mxu0
        %v506 = vld [vmem:[%s318] sm:$0xff]
        %v507 = vld [vmem:[%s318 + $0x8] sm:$0xff]
        %v508 = vld [vmem:[%s318 + $0x10] sm:$0xff]
        %v509 = vld [vmem:[%s318 + $0x18] sm:$0xff]
        %v510 = vld [vmem:[%s318 + $0x20] sm:$0xff]
        %v511 = vld [vmem:[%s318 + $0x28] sm:$0xff]
        %v512 = vld [vmem:[%s318 + $0x30] sm:$0xff]
        %v513 = vld [vmem:[%s318 + $0x38] sm:$0xff]
        %v514 = vld [vmem:[%s318 + $0x40] sm:$0xff]
        %v515 = vld [vmem:[%s318 + $0x48] sm:$0xff]
        %v516 = vld [vmem:[%s318 + $0x50] sm:$0xff]
        %v517 = vld [vmem:[%s318 + $0x58] sm:$0xff]
        %v518 = vld [vmem:[%s318 + $0x60] sm:$0xff]
        %v519 = vld [vmem:[%s318 + $0x68] sm:$0xff]
        %v520 = vld [vmem:[%s318 + $0x70] sm:$0xff]
        %v521 = vld [vmem:[%s318 + $0x78] sm:$0xff]
        %v522 = vld [vmem:[%s322] sm:$0x1]
        %s523 = smul.u32 %s27, 128
        %v524 = vlaneseq
        %v525 = vshrl.u32 %v524, 7
        %v526 = vadd.s32 %v525, 8
        %v527 = vadd.s32 %v525, 16
        %v528 = vadd.s32 %v525, 24
        %v529 = vadd.s32 %v525, 32
        %v530 = vadd.s32 %v525, 40
        %v531 = vadd.s32 %v525, 48
        %v532 = vadd.s32 %v525, 56
        %v533 = vadd.s32 %v525, 64
        %v534 = vadd.s32 %v525, 72
        %v535 = vadd.s32 %v525, 80
        %v536 = vadd.s32 %v525, 88
        %v537 = vadd.s32 %v525, 96
        %v538 = vadd.s32 %v525, 104
        %v539 = vadd.s32 %v525, 112
        %v540 = vadd.s32 %v525, 120
        %v541 = vstv %s523
        %v542 = vadd.s32 %v541, %v525
        %v543 = vadd.s32 %v541, %v526
        %v544 = vadd.s32 %v541, %v527
        %v545 = vadd.s32 %v541, %v528
        %v546 = vadd.s32 %v541, %v529
        %v547 = vadd.s32 %v541, %v530
        %v548 = vadd.s32 %v541, %v531
        %v549 = vadd.s32 %v541, %v532
        %v550 = vadd.s32 %v541, %v533
        %v551 = vadd.s32 %v541, %v534
        %v552 = vadd.s32 %v541, %v535
        %v553 = vadd.s32 %v541, %v536
        %v554 = vadd.s32 %v541, %v537
        %v555 = vadd.s32 %v541, %v538
        %v556 = vadd.s32 %v541, %v539
        %v557 = vadd.s32 %v541, %v540
        %s558 = smul.u32 %s28, 128
        %v559 = vlaneseq
        %v560 = vand.u32 %v559, 127
        %v561 = vstv %s558
        %v562 = vadd.s32 %v561, %v560
        %vm563 = vcmp.eq.s32.totalorder %v542, %v562
        %vm564 = vcmp.eq.s32.totalorder %v543, %v562
        %vm565 = vcmp.eq.s32.totalorder %v544, %v562
        %vm566 = vcmp.eq.s32.totalorder %v545, %v562
        %vm567 = vcmp.eq.s32.totalorder %v546, %v562
        %vm568 = vcmp.eq.s32.totalorder %v547, %v562
        %vm569 = vcmp.eq.s32.totalorder %v548, %v562
        %vm570 = vcmp.eq.s32.totalorder %v549, %v562
        %vm571 = vcmp.eq.s32.totalorder %v550, %v562
        %vm572 = vcmp.eq.s32.totalorder %v551, %v562
        %vm573 = vcmp.eq.s32.totalorder %v552, %v562
        %vm574 = vcmp.eq.s32.totalorder %v553, %v562
        %vm575 = vcmp.eq.s32.totalorder %v554, %v562
        %vm576 = vcmp.eq.s32.totalorder %v555, %v562
        %vm577 = vcmp.eq.s32.totalorder %v556, %v562
        %vm578 = vcmp.eq.s32.totalorder %v557, %v562
        %vm579 = vcmp.ge.s32.totalorder %v542, 300
        %vm580 = vcmp.ge.s32.totalorder %v543, 300
        %vm581 = vcmp.ge.s32.totalorder %v544, 300
        %vm582 = vcmp.ge.s32.totalorder %v545, 300
        %vm583 = vcmp.ge.s32.totalorder %v546, 300
        %vm584 = vcmp.ge.s32.totalorder %v547, 300
        %vm585 = vcmp.ge.s32.totalorder %v548, 300
        %vm586 = vcmp.ge.s32.totalorder %v549, 300
        %vm587 = vcmp.ge.s32.totalorder %v550, 300
        %vm588 = vcmp.ge.s32.totalorder %v551, 300
        %vm589 = vcmp.ge.s32.totalorder %v552, 300
        %vm590 = vcmp.ge.s32.totalorder %v553, 300
        %vm591 = vcmp.ge.s32.totalorder %v554, 300
        %vm592 = vcmp.ge.s32.totalorder %v555, 300
        %vm593 = vcmp.ge.s32.totalorder %v556, 300
        %vm594 = vcmp.ge.s32.totalorder %v557, 300
        %v595 = vsel %vm579, 1, 0
        %v596 = vsel %vm580, 1, 0
        %v597 = vsel %vm581, 1, 0
        %v598 = vsel %vm582, 1, 0
        %v599 = vsel %vm583, 1, 0
        %v600 = vsel %vm584, 1, 0
        %v601 = vsel %vm585, 1, 0
        %v602 = vsel %vm586, 1, 0
        %v603 = vsel %vm587, 1, 0
        %v604 = vsel %vm588, 1, 0
        %v605 = vsel %vm589, 1, 0
        %v606 = vsel %vm590, 1, 0
        %v607 = vsel %vm591, 1, 0
        %v608 = vsel %vm592, 1, 0
        %v609 = vsel %vm593, 1, 0
        %v610 = vsel %vm594, 1, 0
        %vm611 = vcmp.eq.s32.totalorder %v595, 1
        %vm612 = vcmp.eq.s32.totalorder %v596, 1
        %vm613 = vcmp.eq.s32.totalorder %v597, 1
        %vm614 = vcmp.eq.s32.totalorder %v598, 1
        %vm615 = vcmp.eq.s32.totalorder %v599, 1
        %vm616 = vcmp.eq.s32.totalorder %v600, 1
        %vm617 = vcmp.eq.s32.totalorder %v601, 1
        %vm618 = vcmp.eq.s32.totalorder %v602, 1
        %vm619 = vcmp.eq.s32.totalorder %v603, 1
        %vm620 = vcmp.eq.s32.totalorder %v604, 1
        %vm621 = vcmp.eq.s32.totalorder %v605, 1
        %vm622 = vcmp.eq.s32.totalorder %v606, 1
        %vm623 = vcmp.eq.s32.totalorder %v607, 1
        %vm624 = vcmp.eq.s32.totalorder %v608, 1
        %vm625 = vcmp.eq.s32.totalorder %v609, 1
        %vm626 = vcmp.eq.s32.totalorder %v610, 1
        %vm627 = vmor %vm563, %vm611
        %vm628 = vmor %vm564, %vm612
        %vm629 = vmor %vm565, %vm613
        %vm630 = vmor %vm566, %vm614
        %vm631 = vmor %vm567, %vm615
        %vm632 = vmor %vm568, %vm616
        %vm633 = vmor %vm569, %vm617
        %vm634 = vmor %vm570, %vm618
        %vm635 = vmor %vm571, %vm619
        %vm636 = vmor %vm572, %vm620
        %vm637 = vmor %vm573, %vm621
        %vm638 = vmor %vm574, %vm622
        %vm639 = vmor %vm575, %vm623
        %vm640 = vmor %vm576, %vm624
        %vm641 = vmor %vm577, %vm625
        %vm642 = vmor %vm578, %vm626
        %vm643 = vcmp.ge.s32.totalorder %v562, 300
        %v644 = vsel %vm643, 1, 0
        %vm645 = vcmp.eq.s32.totalorder %v644, 1
        %vm646 = vmor %vm627, %vm645
        %vm647 = vmor %vm628, %vm645
        %vm648 = vmor %vm629, %vm645
        %vm649 = vmor %vm630, %vm645
        %vm650 = vmor %vm631, %vm645
        %vm651 = vmor %vm632, %vm645
        %vm652 = vmor %vm633, %vm645
        %vm653 = vmor %vm634, %vm645
        %vm654 = vmor %vm635, %vm645
        %vm655 = vmor %vm636, %vm645
        %vm656 = vmor %vm637, %vm645
        %vm657 = vmor %vm638, %vm645
        %vm658 = vmor %vm639, %vm645
        %vm659 = vmor %vm640, %vm645
        %vm660 = vmor %vm641, %vm645
        %vm661 = vmor %vm642, %vm645
        %v662 = vsel %vm646, -1e+30, %v428
        %v663 = vsel %vm647, -1e+30, %v433
        %v664 = vsel %vm648, -1e+30, %v438
        %v665 = vsel %vm649, -1e+30, %v443
        %v666 = vsel %vm650, -1e+30, %v448
        %v667 = vsel %vm651, -1e+30, %v453
        %v668 = vsel %vm652, -1e+30, %v458
        %v669 = vsel %vm653, -1e+30, %v463
        %v670 = vsel %vm654, -1e+30, %v468
        %v671 = vsel %vm655, -1e+30, %v473
        %v672 = vsel %vm656, -1e+30, %v478
        %v673 = vsel %vm657, -1e+30, %v483
        %v674 = vsel %vm658, -1e+30, %v488
        %v675 = vsel %vm659, -1e+30, %v493
        %v676 = vsel %vm660, -1e+30, %v498
        %v677 = vsel %vm661, -1e+30, %v503
        %v678 = vsub.f32 0.3, %v506
        %v679 = vsub.f32 0.3, %v507
        %v680 = vsub.f32 0.3, %v508
        %v681 = vsub.f32 0.3, %v509
        %v682 = vsub.f32 0.3, %v510
        %v683 = vsub.f32 0.3, %v511
        %v684 = vsub.f32 0.3, %v512
        %v685 = vsub.f32 0.3, %v513
        %v686 = vsub.f32 0.3, %v514
        %v687 = vsub.f32 0.3, %v515
        %v688 = vsub.f32 0.3, %v516
        %v689 = vsub.f32 0.3, %v517
        %v690 = vsub.f32 0.3, %v518
        %v691 = vsub.f32 0.3, %v519
        %v692 = vsub.f32 0.3, %v520
        %v693 = vsub.f32 0.3, %v521
        %695 = vset.pattern.permute.xlu0 0
        %696 = vperm.xlu0 %695, %v678
        %v697 = vpop.permute.xlu0 %696
        %700 = vset.pattern.permute.xlu0 0
        %701 = vperm.xlu0 %700, %v679
        %v702 = vpop.permute.xlu0 %701
        %705 = vset.pattern.permute.xlu0 0
        %706 = vperm.xlu0 %705, %v680
        %v707 = vpop.permute.xlu0 %706
        %710 = vset.pattern.permute.xlu0 0
        %711 = vperm.xlu0 %710, %v681
        %v712 = vpop.permute.xlu0 %711
        %715 = vset.pattern.permute.xlu0 0
        %716 = vperm.xlu0 %715, %v682
        %v717 = vpop.permute.xlu0 %716
        %720 = vset.pattern.permute.xlu0 0
        %721 = vperm.xlu0 %720, %v683
        %v722 = vpop.permute.xlu0 %721
        %725 = vset.pattern.permute.xlu0 0
        %726 = vperm.xlu0 %725, %v684
        %v727 = vpop.permute.xlu0 %726
        %730 = vset.pattern.permute.xlu0 0
        %731 = vperm.xlu0 %730, %v685
        %v732 = vpop.permute.xlu0 %731
        %735 = vset.pattern.permute.xlu0 0
        %736 = vperm.xlu0 %735, %v686
        %v737 = vpop.permute.xlu0 %736
        %740 = vset.pattern.permute.xlu0 0
        %741 = vperm.xlu0 %740, %v687
        %v742 = vpop.permute.xlu0 %741
        %745 = vset.pattern.permute.xlu0 0
        %746 = vperm.xlu0 %745, %v688
        %v747 = vpop.permute.xlu0 %746
        %750 = vset.pattern.permute.xlu0 0
        %751 = vperm.xlu0 %750, %v689
        %v752 = vpop.permute.xlu0 %751
        %755 = vset.pattern.permute.xlu0 0
        %756 = vperm.xlu0 %755, %v690
        %v757 = vpop.permute.xlu0 %756
        %760 = vset.pattern.permute.xlu0 0
        %761 = vperm.xlu0 %760, %v691
        %v762 = vpop.permute.xlu0 %761
        %765 = vset.pattern.permute.xlu0 0
        %766 = vperm.xlu0 %765, %v692
        %v767 = vpop.permute.xlu0 %766
        %770 = vset.pattern.permute.xlu0 0
        %771 = vperm.xlu0 %770, %v693
        %v772 = vpop.permute.xlu0 %771
        %v774 = vadd.f32 %v662, %v697
        %v775 = vadd.f32 %v663, %v702
        %v776 = vadd.f32 %v664, %v707
        %v777 = vadd.f32 %v665, %v712
        %v778 = vadd.f32 %v666, %v717
        %v779 = vadd.f32 %v667, %v722
        %v780 = vadd.f32 %v668, %v727
        %v781 = vadd.f32 %v669, %v732
        %v782 = vadd.f32 %v670, %v737
        %v783 = vadd.f32 %v671, %v742
        %v784 = vadd.f32 %v672, %v747
        %v785 = vadd.f32 %v673, %v752
        %v786 = vadd.f32 %v674, %v757
        %v787 = vadd.f32 %v675, %v762
        %v788 = vadd.f32 %v676, %v767
        %v789 = vadd.f32 %v677, %v772
        %v790 = vmax.f32 %v774, 0.0
        %v791 = vmax.f32 %v775, 0.0
        %v792 = vmax.f32 %v776, 0.0
        %v793 = vmax.f32 %v777, 0.0
        %v794 = vmax.f32 %v778, 0.0
        %v795 = vmax.f32 %v779, 0.0
        %v796 = vmax.f32 %v780, 0.0
        %v797 = vmax.f32 %v781, 0.0
        %v798 = vmax.f32 %v782, 0.0
        %v799 = vmax.f32 %v783, 0.0
        %v800 = vmax.f32 %v784, 0.0
        %v801 = vmax.f32 %v785, 0.0
        %v802 = vmax.f32 %v786, 0.0
        %v803 = vmax.f32 %v787, 0.0
        %v804 = vmax.f32 %v788, 0.0
        %v805 = vmax.f32 %v789, 0.0
        %v806 = vsub.f32 0.3, %v522
        %v808 = vlaneseq
        %v809 = vshrl.u32 %v808, 7
        %v810 = vsub.s32 0, %v809
        %v811 = vrot.slane %v806, %v810
        %v813 = vadd.f32 %v662, %v811
        %v814 = vadd.f32 %v663, %v811
        %v815 = vadd.f32 %v664, %v811
        %v816 = vadd.f32 %v665, %v811
        %v817 = vadd.f32 %v666, %v811
        %v818 = vadd.f32 %v667, %v811
        %v819 = vadd.f32 %v668, %v811
        %v820 = vadd.f32 %v669, %v811
        %v821 = vadd.f32 %v670, %v811
        %v822 = vadd.f32 %v671, %v811
        %v823 = vadd.f32 %v672, %v811
        %v824 = vadd.f32 %v673, %v811
        %v825 = vadd.f32 %v674, %v811
        %v826 = vadd.f32 %v675, %v811
        %v827 = vadd.f32 %v676, %v811
        %v828 = vadd.f32 %v677, %v811
        %v829 = vmax.f32 %v813, 0.0
        %v830 = vmax.f32 %v814, 0.0
        %v831 = vmax.f32 %v815, 0.0
        %v832 = vmax.f32 %v816, 0.0
        %v833 = vmax.f32 %v817, 0.0
        %v834 = vmax.f32 %v818, 0.0
        %v835 = vmax.f32 %v819, 0.0
        %v836 = vmax.f32 %v820, 0.0
        %v837 = vmax.f32 %v821, 0.0
        %v838 = vmax.f32 %v822, 0.0
        %v839 = vmax.f32 %v823, 0.0
        %v840 = vmax.f32 %v824, 0.0
        %v841 = vmax.f32 %v825, 0.0
        %v842 = vmax.f32 %v826, 0.0
        %v843 = vmax.f32 %v827, 0.0
        %v844 = vmax.f32 %v828, 0.0
        %v845 = vmax.f32 %v829, %v833
        %v846 = vmax.f32 %v830, %v834
        %v847 = vmax.f32 %v831, %v835
        %v848 = vmax.f32 %v832, %v836
        %v849 = vmax.f32 %v845, %v837
        %v850 = vmax.f32 %v846, %v838
        %v851 = vmax.f32 %v847, %v839
        %v852 = vmax.f32 %v848, %v840
        %v853 = vmax.f32 %v849, %v841
        %v854 = vmax.f32 %v850, %v842
        %v855 = vmax.f32 %v851, %v843
        %v856 = vmax.f32 %v852, %v844
        %v857 = vmax.f32 %v853, %v854
        %v858 = vmax.f32 %v855, %v856
        %v859 = vmax.f32 %v857, %v858
        %v860 = vrot.slane %v859, 4
        %v861 = vmax.f32 %v859, %v860
        %v862 = vrot.slane %v861, 2
        %v863 = vmax.f32 %v861, %v862
        %v864 = vrot.slane %v863, 1
        %v865 = vmax.f32 %v863, %v864
        %866 = vst [vmem:[%s306] sm:$0x1] %v865
        %867 = vmax.xlane.f32.xlu0 %v790
        %v868 = vpop.xlane.xlu0 %867
        %869 = vmax.xlane.f32.xlu0 %v791
        %v870 = vpop.xlane.xlu0 %869
        %871 = vmax.xlane.f32.xlu0 %v792
        %v872 = vpop.xlane.xlu0 %871
        %873 = vmax.xlane.f32.xlu0 %v793
        %v874 = vpop.xlane.xlu0 %873
        %875 = vmax.xlane.f32.xlu0 %v794
        %v876 = vpop.xlane.xlu0 %875
        %877 = vmax.xlane.f32.xlu0 %v795
        %v878 = vpop.xlane.xlu0 %877
        %879 = vmax.xlane.f32.xlu0 %v796
        %v880 = vpop.xlane.xlu0 %879
        %881 = vmax.xlane.f32.xlu0 %v797
        %v882 = vpop.xlane.xlu0 %881
        %883 = vmax.xlane.f32.xlu0 %v798
        %v884 = vpop.xlane.xlu0 %883
        %885 = vmax.xlane.f32.xlu0 %v799
        %v886 = vpop.xlane.xlu0 %885
        %887 = vmax.xlane.f32.xlu0 %v800
        %v888 = vpop.xlane.xlu0 %887
        %889 = vmax.xlane.f32.xlu0 %v801
        %v890 = vpop.xlane.xlu0 %889
        %891 = vmax.xlane.f32.xlu0 %v802
        %v892 = vpop.xlane.xlu0 %891
        %893 = vmax.xlane.f32.xlu0 %v803
        %v894 = vpop.xlane.xlu0 %893
        %895 = vmax.xlane.f32.xlu0 %v804
        %v896 = vpop.xlane.xlu0 %895
        %897 = vmax.xlane.f32.xlu0 %v805
        %v898 = vpop.xlane.xlu0 %897
        %p899 = scmp.eq.s32.totalorder %s28, 0
        // Predicated region
        $region41: #{tpu_custom_call.1} parent=35 // pred_check
          %p900 = pneg %p899
        $region42: #{tpu_custom_call.1} parent=35 // pred_check_branch
          %902 = sbr.rel (%p900) target = $region44
        $region43: #{tpu_custom_call.1} parent=35 // pred_region
          %vm903 = vcmask 7168
          %904 = vst.msk [vmem:[#allocation2] sm:$0xff] %vm903, %v868
          %905 = vst.msk [vmem:[#allocation2 + $0x8] sm:$0xff] %vm903, %v870
          %906 = vst.msk [vmem:[#allocation2 + $0x10] sm:$0xff] %vm903, %v872
          %907 = vst.msk [vmem:[#allocation2 + $0x18] sm:$0xff] %vm903, %v874
          %908 = vst.msk [vmem:[#allocation2 + $0x20] sm:$0xff] %vm903, %v876
          %909 = vst.msk [vmem:[#allocation2 + $0x28] sm:$0xff] %vm903, %v878
          %910 = vst.msk [vmem:[#allocation2 + $0x30] sm:$0xff] %vm903, %v880
          %911 = vst.msk [vmem:[#allocation2 + $0x38] sm:$0xff] %vm903, %v882
          %912 = vst.msk [vmem:[#allocation2 + $0x40] sm:$0xff] %vm903, %v884
          %913 = vst.msk [vmem:[#allocation2 + $0x48] sm:$0xff] %vm903, %v886
          %914 = vst.msk [vmem:[#allocation2 + $0x50] sm:$0xff] %vm903, %v888
          %915 = vst.msk [vmem:[#allocation2 + $0x58] sm:$0xff] %vm903, %v890
          %916 = vst.msk [vmem:[#allocation2 + $0x60] sm:$0xff] %vm903, %v892
          %917 = vst.msk [vmem:[#allocation2 + $0x68] sm:$0xff] %vm903, %v894
          %918 = vst.msk [vmem:[#allocation2 + $0x70] sm:$0xff] %vm903, %v896
          %919 = vst.msk [vmem:[#allocation2 + $0x78] sm:$0xff] %vm903, %v898
        $region44: #{tpu_custom_call.1} parent=35 // pred_fallthru
          _
        %p920 = scmp.gt.s32.totalorder %s28, 0
        // Predicated region
        $region45: #{tpu_custom_call.1} parent=35 // pred_check
          %p921 = pneg %p920
        $region46: #{tpu_custom_call.1} parent=35 // pred_check_branch
          %923 = sbr.rel (%p921) target = $region48
        $region47: #{tpu_custom_call.1} parent=35 // pred_region
          %v924 = vld [vmem:[#allocation2] sm:$0xff]
          %v925 = vld [vmem:[#allocation2 + $0x8] sm:$0xff]
          %v926 = vld [vmem:[#allocation2 + $0x10] sm:$0xff]
          %v927 = vld [vmem:[#allocation2 + $0x18] sm:$0xff]
          %v928 = vld [vmem:[#allocation2 + $0x20] sm:$0xff]
          %v929 = vld [vmem:[#allocation2 + $0x28] sm:$0xff]
          %v930 = vld [vmem:[#allocation2 + $0x30] sm:$0xff]
          %v931 = vld [vmem:[#allocation2 + $0x38] sm:$0xff]
          %v932 = vld [vmem:[#allocation2 + $0x40] sm:$0xff]
          %v933 = vld [vmem:[#allocation2 + $0x48] sm:$0xff]
          %v934 = vld [vmem:[#allocation2 + $0x50] sm:$0xff]
          %v935 = vld [vmem:[#allocation2 + $0x58] sm:$0xff]
          %v936 = vld [vmem:[#allocation2 + $0x60] sm:$0xff]
          %v937 = vld [vmem:[#allocation2 + $0x68] sm:$0xff]
          %v938 = vld [vmem:[#allocation2 + $0x70] sm:$0xff]
          %v939 = vld [vmem:[#allocation2 + $0x78] sm:$0xff]
          %v940 = vmax.f32 %v924, %v868
          %v941 = vmax.f32 %v925, %v870
          %v942 = vmax.f32 %v926, %v872
          %v943 = vmax.f32 %v927, %v874
          %v944 = vmax.f32 %v928, %v876
          %v945 = vmax.f32 %v929, %v878
          %v946 = vmax.f32 %v930, %v880
          %v947 = vmax.f32 %v931, %v882
          %v948 = vmax.f32 %v932, %v884
          %v949 = vmax.f32 %v933, %v886
          %v950 = vmax.f32 %v934, %v888
          %v951 = vmax.f32 %v935, %v890
          %v952 = vmax.f32 %v936, %v892
          %v953 = vmax.f32 %v937, %v894
          %v954 = vmax.f32 %v938, %v896
          %v955 = vmax.f32 %v939, %v898
          %vm956 = vcmask 7168
          %957 = vst.msk [vmem:[#allocation2] sm:$0xff] %vm956, %v940
          %958 = vst.msk [vmem:[#allocation2 + $0x8] sm:$0xff] %vm956, %v941
          %959 = vst.msk [vmem:[#allocation2 + $0x10] sm:$0xff] %vm956, %v942
          %960 = vst.msk [vmem:[#allocation2 + $0x18] sm:$0xff] %vm956, %v943
          %961 = vst.msk [vmem:[#allocation2 + $0x20] sm:$0xff] %vm956, %v944
          %962 = vst.msk [vmem:[#allocation2 + $0x28] sm:$0xff] %vm956, %v945
          %963 = vst.msk [vmem:[#allocation2 + $0x30] sm:$0xff] %vm956, %v946
          %964 = vst.msk [vmem:[#allocation2 + $0x38] sm:$0xff] %vm956, %v947
          %965 = vst.msk [vmem:[#allocation2 + $0x40] sm:$0xff] %vm956, %v948
          %966 = vst.msk [vmem:[#allocation2 + $0x48] sm:$0xff] %vm956, %v949
          %967 = vst.msk [vmem:[#allocation2 + $0x50] sm:$0xff] %vm956, %v950
          %968 = vst.msk [vmem:[#allocation2 + $0x58] sm:$0xff] %vm956, %v951
          %969 = vst.msk [vmem:[#allocation2 + $0x60] sm:$0xff] %vm956, %v952
          %970 = vst.msk [vmem:[#allocation2 + $0x68] sm:$0xff] %vm956, %v953
          %971 = vst.msk [vmem:[#allocation2 + $0x70] sm:$0xff] %vm956, %v954
          %972 = vst.msk [vmem:[#allocation2 + $0x78] sm:$0xff] %vm956, %v955
        $region48: #{tpu_custom_call.1} parent=35 // pred_fallthru
          _
        %p973 = scmp.eq.s32.totalorder %s28, 2
        // Predicated region
        $region49: #{tpu_custom_call.1} parent=35 // pred_check
          %p974 = pneg %p973
        $region50: #{tpu_custom_call.1} parent=35 // pred_check_branch
          %976 = sbr.rel (%p974) target = $region52
        $region51: #{tpu_custom_call.1} parent=35 // pred_region
          %v977 = vld [vmem:[#allocation2] sm:$0xff]
          %v978 = vld [vmem:[#allocation2 + $0x8] sm:$0xff]
          %v979 = vld [vmem:[#allocation2 + $0x10] sm:$0xff]
          %v980 = vld [vmem:[#allocation2 + $0x18] sm:$0xff]
          %v981 = vld [vmem:[#allocation2 + $0x20] sm:$0xff]
          %v982 = vld [vmem:[#allocation2 + $0x28] sm:$0xff]
          %v983 = vld [vmem:[#allocation2 + $0x30] sm:$0xff]
          %v984 = vld [vmem:[#allocation2 + $0x38] sm:$0xff]
          %v985 = vld [vmem:[#allocation2 + $0x40] sm:$0xff]
          %v986 = vld [vmem:[#allocation2 + $0x48] sm:$0xff]
          %v987 = vld [vmem:[#allocation2 + $0x50] sm:$0xff]
          %v988 = vld [vmem:[#allocation2 + $0x58] sm:$0xff]
          %v989 = vld [vmem:[#allocation2 + $0x60] sm:$0xff]
          %v990 = vld [vmem:[#allocation2 + $0x68] sm:$0xff]
          %v991 = vld [vmem:[#allocation2 + $0x70] sm:$0xff]
          %v992 = vld [vmem:[#allocation2 + $0x78] sm:$0xff]
          %vm993 = vcmask 7168
          %994 = vst.msk [vmem:[%s327] sm:$0xff] %vm993, %v977
          %995 = vst.msk [vmem:[%s327 + $0x8] sm:$0xff] %vm993, %v978
          %996 = vst.msk [vmem:[%s327 + $0x10] sm:$0xff] %vm993, %v979
          %997 = vst.msk [vmem:[%s327 + $0x18] sm:$0xff] %vm993, %v980
          %998 = vst.msk [vmem:[%s327 + $0x20] sm:$0xff] %vm993, %v981
          %999 = vst.msk [vmem:[%s327 + $0x28] sm:$0xff] %vm993, %v982
          %1000 = vst.msk [vmem:[%s327 + $0x30] sm:$0xff] %vm993, %v983
          %1001 = vst.msk [vmem:[%s327 + $0x38] sm:$0xff] %vm993, %v984
          %1002 = vst.msk [vmem:[%s327 + $0x40] sm:$0xff] %vm993, %v985
          %1003 = vst.msk [vmem:[%s327 + $0x48] sm:$0xff] %vm993, %v986
          %1004 = vst.msk [vmem:[%s327 + $0x50] sm:$0xff] %vm993, %v987
          %1005 = vst.msk [vmem:[%s327 + $0x58] sm:$0xff] %vm993, %v988
          %1006 = vst.msk [vmem:[%s327 + $0x60] sm:$0xff] %vm993, %v989
          %1007 = vst.msk [vmem:[%s327 + $0x68] sm:$0xff] %vm993, %v990
          %1008 = vst.msk [vmem:[%s327 + $0x70] sm:$0xff] %vm993, %v991
          %1009 = vst.msk [vmem:[%s327 + $0x78] sm:$0xff] %vm993, %v992
        $region52: #{tpu_custom_call.1} parent=35 // pred_fallthru
          _
        %s1010 = smul.u32 16, %s27
        %p1011 = scmp.lt.s32.totalorder %s1010, 47
        %s1012 = scalar_select %p1011, %s1010, 47
        %s1013 = smul.addr %s1012, 8
        %s1014 = scalar_lea.vmem %s4, %s1013
        %s1015 = sand.u32 %s175, 1
        %s1016 = scalar_lea.sflag [#allocation5], %s1015
        %s1017 = sand.u32 %s175, 1
        %s1018 = scalar_lea.vmem [#allocation6], %s1017
        // Predicated region
        $region53: #{tpu_custom_call.1} parent=35 // pred_check
          %p1019 = pneg %p157
        $region54: #{tpu_custom_call.1} parent=35 // pred_check_branch
          %1021 = sbr.rel (%p1019) target = $region56
        $region55: #{tpu_custom_call.1} parent=35 // pred_region
          %s1022 = smul.u32 16, %s27
        $region56: #{tpu_custom_call.1} parent=35 // pred_fallthru
          _
        // Predicated region
        $region57: #{tpu_custom_call.1} parent=35 // pred_check
          %p1023 = pneg %p185
        $region58: #{tpu_custom_call.1} parent=35 // pred_check_branch
          %1025 = sbr.rel (%p1023) target = $region60
        $region59: #{tpu_custom_call.1} parent=35 // pred_region
          %s1027 = ssub.s32 16, 16
          %1028 = vsyncadd %s1016, %s1027
          %s1029 = smul.addr %s27, 3
          %s1030 = sadd.s32 %s28, %s1029
          %s1031 = smul.addr %s1030, 16
          %s1032 = scalar_lea.hbm %s5, %s1031
          %s1034 = sshll.u32 %s1018, 4
          %s1035 = int_to_ptr.vmem [resolvable:$true] %s1034
          %1037 = dma.vmem_to_hbm [thread:$0]  %s1035, 16, %s1032, %s1016
        $region60: #{tpu_custom_call.1} parent=35 // pred_fallthru
          _
      $region36: #{tpu_custom_call.1} parent=5 // pred_fallthru
        _
      %p1038 = scmp.le.s32.totalorder 2, %s18
      // Predicated region
      $region61: #{tpu_custom_call.1} parent=5 // pred_check
        %p1039 = pneg %p1038
      $region62: #{tpu_custom_call.1} parent=5 // pred_check_branch
        %1041 = sbr.rel (%p1039) target = $region64
      $region63: #{tpu_custom_call.1} parent=5 // pred_region
        %s1042 = ssub.s32 %s18, 2
        // Predicated region
        $region65: #{tpu_custom_call.1} parent=63 // pred_check
          %p1043 = pneg %p163
        $region66: #{tpu_custom_call.1} parent=63 // pred_check_branch
          %1045 = sbr.rel (%p1043) target = $region68
        $region67: #{tpu_custom_call.1} parent=63 // pred_region
          %s1046 = smul.u32 16, %s29
          %p1047 = scmp.lt.s32.totalorder %s1046, 47
          %s1048 = scalar_select %p1047, %s1046, 47
          %s1049 = smul.addr %s1048, 8
          %s1050 = scalar_lea.vmem %s4, %s1049
        $region68: #{tpu_custom_call.1} parent=63 // pred_fallthru
          _
        // Predicated region
        $region69: #{tpu_custom_call.1} parent=63 // pred_check
          %p1051 = pneg %p191
        $region70: #{tpu_custom_call.1} parent=63 // pred_check_branch
          %1053 = sbr.rel (%p1051) target = $region72
        $region71: #{tpu_custom_call.1} parent=63 // pred_region
          %s1054 = sand.u32 %s176, 1
          %s1055 = scalar_lea.sflag [#allocation5], %s1054
          %s1056 = sand.u32 %s176, 1
          %s1057 = scalar_lea.vmem [#allocation6], %s1056
          %1058 = dma.done %s1055, 16
        $region72: #{tpu_custom_call.1} parent=63 // pred_fallthru
          _
      $region64: #{tpu_custom_call.1} parent=5 // pred_fallthru
        _
    $region6: #{tpu_custom_call.1} parent=1 // loop_footer
      %s22 = sadd.s32 1, %s18
    $region7: #{tpu_custom_call.1} parent=1 // loop_footer_branch
      %17 = sbr.rel target = $region3
    $region8: #{tpu_custom_call.1} parent=1 // loop_exit
      _
    %1059 = vsyncpa [#allocation4], 1
    %s1060 = scalar_lea.sflag [#allocation4], 1
    %1061 = vsyncpa %s1060, 1
    %1062 = vsyncpa [#allocation5], 1
    %s1063 = scalar_lea.sflag [#allocation5], 1
    %1064 = vsyncpa %s1063, 1

</llo_original>
